<compile_context>
chip_gen: v6e
topology: v6e:2x2x1
jax: 0.10.0
libtpu: 0.0.40
codegen_flags: <defaults>
</compile_context>

<pallas_src>
import jax
import jax.numpy as jnp
from jax.experimental import pallas as pl
from jax.experimental.pallas import tpu as pltpu


# ---------------------------------------------------------------------------
# Kernel
# ---------------------------------------------------------------------------
def basic_block_kernel(xp_ref, xres_ref,
                       g_ref, s1_ref, b1_ref,
                       h_ref, s2_ref, b2_ref,
                       out_ref, mid_ref):
    # xp_ref  : (NB, H/2+1, 2*W*Cin) bf16  row-pair-packed, y-padded input
    # xres_ref: (NB, H/2,   2*W*C)   f32   row-pair-packed unpadded input (shortcut)
    # g_ref   : (2, 2*W*Cin, 2*W*C)  bf16  packed banded conv1 weights
    # h_ref   : (3, 2*W*C,   2*W*C)  bf16  packed banded conv2 weights
    # s*/b*   : (1, 2*W*C)           f32   folded BN scale / bias (lane-tiled)
    # out_ref : (NB, H/2, 2*W*C)     lane-dense output slab
    # mid_ref : (H/2+2, 2*W*C)       bf16  VMEM scratch; rows 0 and H/2+1 are y halos
    NB, Ho, Lo = out_ref.shape

    # zero only the two packed-halo rows (scratch is fully rewritten per step ->
    # megacore-parallel safe, no reliance on cross-step persistence)
    mid_ref[0:1, :] = jnp.zeros((1, Lo), mid_ref.dtype)
    mid_ref[Ho + 1:Ho + 2, :] = jnp.zeros((1, Lo), mid_ref.dtype)

    for b in range(NB):
        # ---- conv1 (3x3, stride 1, pad 1) + bn1 + relu: 2 packed band matmuls ----
        acc1 = jnp.dot(xp_ref[b, 0:Ho, :], g_ref[0],
                       preferred_element_type=jnp.float32)
        acc1 = acc1 + jnp.dot(xp_ref[b, 1:Ho + 1, :], g_ref[1],
                              preferred_element_type=jnp.float32)
        o1 = jnp.maximum(acc1 * s1_ref[...] + b1_ref[...], 0.0)

        # stash intermediate once, as bf16 (MXU consumes bf16 anyway)
        mid_ref[1:Ho + 1, :] = o1.astype(mid_ref.dtype)

        # ---- conv2 (3x3, stride 1, pad 1) + bn2: 3 packed band matmuls ----
        acc2 = jnp.dot(mid_ref[0:Ho, :], h_ref[0],
                       preferred_element_type=jnp.float32)
        acc2 = acc2 + jnp.dot(mid_ref[1:Ho + 1, :], h_ref[1],
                              preferred_element_type=jnp.float32)
        acc2 = acc2 + jnp.dot(mid_ref[2:Ho + 2, :], h_ref[2],
                              preferred_element_type=jnp.float32)
        o2 = acc2 * s2_ref[...] + b2_ref[...]

        # ---- identity shortcut (f32) + relu, lane-dense store ----
        out_ref[b, :, :] = jnp.maximum(o2 + xres_ref[b, :, :], 0.0).astype(out_ref.dtype)


# ---------------------------------------------------------------------------
# Init-time (hoisted) weight preprocessing
# ---------------------------------------------------------------------------
def _band_weights(w_hwio, W):
    """Fold the 3 x-taps of a 3x3 conv (and the x zero-padding) into banded matrices.

    Returns B of shape (3, W*Cin, W*Cout) with
      B[ky][xi*Cin + ci, xo*Cout + co] = w[ky, xi - xo + 1, ci, co]   (0 outside the band)
    so that  conv_out[y] = sum_ky  x_rowpadded[y + ky, :] @ B[ky].
    """
    _, _, Cin, Cout = w_hwio.shape
    xi = jnp.arange(W)[:, None]
    xo = jnp.arange(W)[None, :]
    kx = xi - xo + 1                                    # (W, W)
    valid = (kx >= 0) & (kx <= 2)
    b = w_hwio[:, jnp.clip(kx, 0, 2), :, :]             # (3, W, W, Cin, Cout)
    b = jnp.where(valid[None, :, :, None, None], b, 0.0)
    b = jnp.transpose(b, (0, 1, 3, 2, 4)).reshape(3, W * Cin, W * Cout)
    return b


def _rowpair_conv1(bands):
    """Fold row-pair packing into the conv1 bands (aligned y-phase: 2 packed taps).

    Packed output super-row t = Xp[t] @ G0 + Xp[t+1] @ G1, where Xp[t] holds padded
    rows (2t, 2t+1) concatenated along lanes.
    """
    B0, B1, B2 = bands[0], bands[1], bands[2]
    Z = jnp.zeros_like(B0)
    g0 = jnp.concatenate([jnp.concatenate([B0, Z], axis=1),
                          jnp.concatenate([B1, B0], axis=1)], axis=0)
    g1 = jnp.concatenate([jnp.concatenate([B2, B1], axis=1),
                          jnp.concatenate([Z, B2], axis=1)], axis=0)
    return jnp.stack([g0, g1])                           # (2, 2K, 2M)


def _rowpair_conv2(bands):
    """Fold row-pair packing into the conv2 bands (centred y-phase: 3 packed taps).

    Packed output super-row t = P[t-1] @ Hm1 + P[t] @ H0 + P[t+1] @ Hp1, where P[t]
    holds conv1-output rows (2t, 2t+1); P[-1] and P[H/2] are zero (y padding).
    """
    B0, B1, B2 = bands[0], bands[1], bands[2]
    Z = jnp.zeros_like(B0)
    hm1 = jnp.concatenate([jnp.concatenate([Z, Z], axis=1),
                           jnp.concatenate([B0, Z], axis=1)], axis=0)
    h0 = jnp.concatenate([jnp.concatenate([B1, B0], axis=1),
                          jnp.concatenate([B2, B1], axis=1)], axis=0)
    hp1 = jnp.concatenate([jnp.concatenate([Z, B2], axis=1),
                           jnp.concatenate([Z, Z], axis=1)], axis=0)
    return jnp.stack([hm1, h0, hp1])                     # (3, 2K, 2M)


def make_basic_block_params(w1_oihw, bn1, w2_oihw, bn2, W, eps=1e-5):
    """One-time prep: banded+packed conv weights and folded BN params (static)."""
    C = w1_oihw.shape[0]
    assert w1_oihw.shape[1] == C and w2_oihw.shape[0] == C and w2_oihw.shape[1] == C, \
        "identity-shortcut configuration only (in_planes == planes, stride == 1)"
    w1 = jnp.transpose(w1_oihw, (2, 3, 1, 0))            # OIHW -> HWIO
    w2 = jnp.transpose(w2_oihw, (2, 3, 1, 0))
    conv1 = _rowpair_conv1(_band_weights(w1, W)).astype(jnp.bfloat16)  # (2, 2WC, 2WC)
    conv2 = _rowpair_conv2(_band_weights(w2, W)).astype(jnp.bfloat16)  # (3, 2WC, 2WC)

    def fold(bn):
        g, b, m, v = bn
        s = g / jnp.sqrt(v + eps)
        t = b - m * s
        # tile per-channel params across the 2*W*C lane dim (row-pair, x-major, c-minor)
        return (jnp.tile(s, 2 * W).reshape(1, 2 * W * C).astype(jnp.float32),
                jnp.tile(t, 2 * W).reshape(1, 2 * W * C).astype(jnp.float32))

    s1, b1 = fold(bn1)
    s2, b2 = fold(bn2)
    return dict(conv1=conv1, conv2=conv2, s1=s1, b1=b1, s2=s2, b2=b2, planes=C, W=W)


# ---------------------------------------------------------------------------
# Call wrappers
# ---------------------------------------------------------------------------
def basic_block_packed(xp_bf16, xres_f32, params):
    """Run the block on activations already in packed lane-dense layout.

    xp_bf16 : (N, H/2+1, 2*W*Cin) bf16   (y-padded, row-pair packed)
    xres_f32: (N, H/2,   2*W*C)   f32    (unpadded, row-pair packed)
    returns : (N, H/2,   2*W*C)   f32
    """
    N, Hp, L = xp_bf16.shape
    _, Ho, Lo = xres_f32.shape

    # >= 2 parallel grid blocks when N >= 2 (keeps both v7x TensorCores busy);
    # for larger even N images are merged into a block (fewer serial grid steps
    # on the single-TensorCore v5e / v6e).
    nb = N // 2 if (N >= 2 and N % 2 == 0) else 1
    grid = (N // nb,)

    return pl.pallas_call(
        basic_block_kernel,
        out_shape=jax.ShapeDtypeStruct((N, Ho, Lo), xres_f32.dtype),
        grid_spec=pltpu.PrefetchScalarGridSpec(
            num_scalar_prefetch=0,
            grid=grid,
            in_specs=[
                pl.BlockSpec((nb, Hp, L), lambda n: (n, 0, 0)),
                pl.BlockSpec((nb, Ho, Lo), lambda n: (n, 0, 0)),
                pl.BlockSpec(params["conv1"].shape, lambda n: (0, 0, 0)),
                pl.BlockSpec((1, Lo), lambda n: (0, 0)),
                pl.BlockSpec((1, Lo), lambda n: (0, 0)),
                pl.BlockSpec(params["conv2"].shape, lambda n: (0, 0, 0)),
                pl.BlockSpec((1, Lo), lambda n: (0, 0)),
                pl.BlockSpec((1, Lo), lambda n: (0, 0)),
            ],
            out_specs=pl.BlockSpec((nb, Ho, Lo), lambda n: (n, 0, 0)),
            scratch_shapes=[pltpu.VMEM((Ho + 2, Lo), jnp.bfloat16)],
        ),
        compiler_params=pltpu.CompilerParams(dimension_semantics=("parallel",)),
    )(xp_bf16, xres_f32, params["conv1"], params["s1"], params["b1"],
      params["conv2"], params["s2"], params["b2"])


def basic_block(x_nchw, params):
    """Convenience NCHW wrapper (layout conversion lives only at the graph edges;
    between stacked blocks activations should stay in the packed layout)."""
    N, Cin, H, W = x_nchw.shape
    C = params["planes"]
    assert Cin == C, "identity-shortcut configuration only (in_planes == planes)"
    assert H % 2 == 0, "row-pair packing requires even H"

    # lane-dense layout (x-major, c-minor), y padding only (x padding is in the bands)
    x_dense = jnp.transpose(x_nchw, (0, 2, 3, 1)).reshape(N, H, W * Cin)
    x_rows = jnp.pad(x_dense, ((0, 0), (1, 1), (0, 0)))
    # contiguous reshapes: pack 2 consecutive y-rows per sublane row (128 lanes here)
    xp = x_rows.reshape(N, H // 2 + 1, 2 * W * Cin).astype(jnp.bfloat16)
    xres = x_dense.reshape(N, H // 2, 2 * W * C)          # shortcut stays f32

    outp = basic_block_packed(xp, xres, params)           # (N, H/2, 2*W*C)
    out = outp.reshape(N, H // 2, 2, W, C).transpose(0, 4, 1, 2, 3).reshape(N, C, H, W)
    return out


# ---------------------------------------------------------------------------
# Pure-JAX reference and self-test
# ---------------------------------------------------------------------------
def reference(x, w1, bn1, w2, bn2, eps=1e-5):
    """Reference with identical (inference-mode BN) semantics, full-precision conv."""
    def conv(a, w):
        return jax.lax.conv_general_dilated(
            a, w, window_strides=(1, 1), padding=((1, 1), (1, 1)),
            dimension_numbers=("NCHW", "OIHW", "NCHW"),
            precision=jax.lax.Precision.HIGHEST)

    def bn(a, p):
        g, b, m, v = p
        s = g / jnp.sqrt(v + eps)
        return a * s[None, :, None, None] + (b - m * s)[None, :, None, None]

    out = jax.nn.relu(bn(conv(x, w1), bn1))
    out = bn(conv(out, w2), bn2)
    return jax.nn.relu(out + x)          # identity shortcut


if __name__ == "__main__":
    key = jax.random.PRNGKey(0)
    ks = jax.random.split(key, 6)
    N, C, H, W = 2, 4, 16, 16            # batch=2, in_planes=planes=4, spatial=16, stride=1

    x = jax.random.normal(ks[0], (N, C, H, W), jnp.float32)
    w1 = 0.1 * jax.random.normal(ks[1], (C, C, 3, 3), jnp.float32)   # conv1 weight (OIHW)
    w2 = 0.1 * jax.random.normal(ks[2], (C, C, 3, 3), jnp.float32)   # conv2 weight (OIHW)

    def bn_params(k):
        k1, k2, k3, k4 = jax.random.split(k, 4)
        gamma = 1.0 + 0.1 * jax.random.normal(k1, (C,), jnp.float32)
        beta = 0.1 * jax.random.normal(k2, (C,), jnp.float32)
        mean = 0.1 * jax.random.normal(k3, (C,), jnp.float32)
        var = 0.5 + jnp.abs(jax.random.normal(k4, (C,), jnp.float32))
        return (gamma, beta, mean, var)

    bn1 = bn_params(ks[3])
    bn2 = bn_params(ks[4])

    # one-time static prep (hoisted out of the per-call hot path)
    params = make_basic_block_params(w1, bn1, w2, bn2, W)

    out = jax.block_until_ready(basic_block(x, params))
    ref = reference(x, w1, bn1, w2, bn2)

    assert out.shape == (N, C, H, W) and out.dtype == jnp.float32
    max_err = float(jnp.max(jnp.abs(out - ref)))
    # bf16 MXU operands (f32 accumulation) + bf16 intermediate through two stacked convs:
    # expect ~1e-3 typical, bounded well under 5e-2 worst case for these O(1) activations.
    if max_err > 5e-2:
        raise SystemExit(f"mismatch vs reference: max abs err = {max_err}")
    print("KERNEL_OK")
</pallas_src>

<mosaic_0001>
module attributes {stable_mosaic.version = 11 : i64} {
  func.func @basic_block_kernel(%arg0: i32, %arg1: memref<1x9x128xbf16, #tpu.memory_space<vmem>>, %arg2: memref<1x8x128xf32, #tpu.memory_space<vmem>>, %arg3: memref<2x128x128xbf16, #tpu.memory_space<vmem>>, %arg4: memref<1x128xf32, #tpu.memory_space<vmem>>, %arg5: memref<1x128xf32, #tpu.memory_space<vmem>>, %arg6: memref<3x128x128xbf16, #tpu.memory_space<vmem>>, %arg7: memref<1x128xf32, #tpu.memory_space<vmem>>, %arg8: memref<1x128xf32, #tpu.memory_space<vmem>>, %arg9: memref<1x8x128xf32, #tpu.memory_space<vmem>>, %arg10: memref<10x128xbf16, #tpu.memory_space<vmem>>) attributes {dimension_semantics = [#tpu.dimension_semantics<parallel>], iteration_bounds = array<i64: 2>, scalar_prefetch = 0 : i64, scratch_operands = 1 : i64, tpu.core_type = #tpu.core_type<tc>, window_params = [{transform_indices = @transform_0, window_bounds = array<i64: 1, 9, 128>}, {transform_indices = @transform_1, window_bounds = array<i64: 1, 8, 128>}, {pipeline_mode = #tpu.pipeline_mode<synchronous>, transform_indices = @transform_2, window_bounds = array<i64: 2, 128, 128>}, {pipeline_mode = #tpu.pipeline_mode<synchronous>, transform_indices = @transform_3, window_bounds = array<i64: 1, 128>}, {pipeline_mode = #tpu.pipeline_mode<synchronous>, transform_indices = @transform_4, window_bounds = array<i64: 1, 128>}, {pipeline_mode = #tpu.pipeline_mode<synchronous>, transform_indices = @transform_5, window_bounds = array<i64: 3, 128, 128>}, {pipeline_mode = #tpu.pipeline_mode<synchronous>, transform_indices = @transform_6, window_bounds = array<i64: 1, 128>}, {pipeline_mode = #tpu.pipeline_mode<synchronous>, transform_indices = @transform_7, window_bounds = array<i64: 1, 128>}, {transform_indices = @transform_8, window_bounds = array<i64: 1, 8, 128>}]} {
    %cst = arith.constant 0.000000e+00 : bf16
    %0 = vector.broadcast %cst : bf16 to vector<1x128xbf16>
    %c0 = arith.constant 0 : index
    %c0_0 = arith.constant 0 : index
    %1 = vector.load %arg10[%c0, %c0_0] : memref<10x128xbf16, #tpu.memory_space<vmem>>, vector<1x128xbf16>
    tpu.vector_store %arg10[%c0, %c0_0], %0 {strides = array<i32>} : memref<10x128xbf16, #tpu.memory_space<vmem>>, vector<1x128xbf16>,
    %cst_1 = arith.constant 0.000000e+00 : bf16
    %2 = vector.broadcast %cst_1 : bf16 to vector<1x128xbf16>
    %c9 = arith.constant 9 : index
    %c0_2 = arith.constant 0 : index
    %3 = vector.load %arg10[%c9, %c0_2] : memref<10x128xbf16, #tpu.memory_space<vmem>>, vector<1x128xbf16>
    tpu.vector_store %arg10[%c9, %c0_2], %2 {strides = array<i32>} : memref<10x128xbf16, #tpu.memory_space<vmem>>, vector<1x128xbf16>,
    %c0_3 = arith.constant 0 : index
    %c0_4 = arith.constant 0 : index
    %c0_5 = arith.constant 0 : index
    %4 = vector.load %arg1[%c0_3, %c0_4, %c0_5] : memref<1x9x128xbf16, #tpu.memory_space<vmem>>, vector<1x8x128xbf16>
    %5 = vector.shape_cast %4 : vector<1x8x128xbf16> to vector<8x128xbf16>
    %c0_6 = arith.constant 0 : index
    %c0_7 = arith.constant 0 : index
    %c0_8 = arith.constant 0 : index
    %6 = vector.load %arg3[%c0_6, %c0_7, %c0_8] : memref<2x128x128xbf16, #tpu.memory_space<vmem>>, vector<1x128x128xbf16>
    %7 = vector.shape_cast %6 : vector<1x128x128xbf16> to vector<128x128xbf16>
    %cst_9 = arith.constant dense<0.000000e+00> : vector<8x128xf32>
    %8 = tpu.matmul %5, %7, %cst_9 {dimension_numbers = #tpu.dot_dimension_numbers<[1], [0], [0], [1], [0, 0, 1, 1], [], []>} : vector<8x128xbf16>, vector<128x128xbf16>, vector<8x128xf32> -> vector<8x128xf32>
    %c0_10 = arith.constant 0 : index
    %c1 = arith.constant 1 : index
    %c0_11 = arith.constant 0 : index
    %9 = vector.load %arg1[%c0_10, %c1, %c0_11] : memref<1x9x128xbf16, #tpu.memory_space<vmem>>, vector<1x8x128xbf16>
    %10 = vector.shape_cast %9 : vector<1x8x128xbf16> to vector<8x128xbf16>
    %c1_12 = arith.constant 1 : index
    %c0_13 = arith.constant 0 : index
    %c0_14 = arith.constant 0 : index
    %11 = vector.load %arg3[%c1_12, %c0_13, %c0_14] : memref<2x128x128xbf16, #tpu.memory_space<vmem>>, vector<1x128x128xbf16>
    %12 = vector.shape_cast %11 : vector<1x128x128xbf16> to vector<128x128xbf16>
    %cst_15 = arith.constant dense<0.000000e+00> : vector<8x128xf32>
    %13 = tpu.matmul %10, %12, %cst_15 {dimension_numbers = #tpu.dot_dimension_numbers<[1], [0], [0], [1], [0, 0, 1, 1], [], []>} : vector<8x128xbf16>, vector<128x128xbf16>, vector<8x128xf32> -> vector<8x128xf32>
    %14 = arith.addf %8, %13 : vector<8x128xf32>
    %c0_16 = arith.constant 0 : index
    %c0_17 = arith.constant 0 : index
    %15 = vector.load %arg4[%c0_16, %c0_17] : memref<1x128xf32, #tpu.memory_space<vmem>>, vector<1x128xf32>
    %16 = vector.broadcast %15 : vector<1x128xf32> to vector<8x128xf32>
    %17 = arith.mulf %14, %16 : vector<8x128xf32>
    %c0_18 = arith.constant 0 : index
    %c0_19 = arith.constant 0 : index
    %18 = vector.load %arg5[%c0_18, %c0_19] : memref<1x128xf32, #tpu.memory_space<vmem>>, vector<1x128xf32>
    %19 = vector.broadcast %18 : vector<1x128xf32> to vector<8x128xf32>
    %20 = arith.addf %17, %19 : vector<8x128xf32>
    %cst_20 = arith.constant 0.000000e+00 : f32
    %21 = vector.broadcast %cst_20 : f32 to vector<8x128xf32>
    %22 = arith.maximumf %20, %21 : vector<8x128xf32>
    %23 = arith.truncf %22 : vector<8x128xf32> to vector<8x128xbf16>
    %c1_21 = arith.constant 1 : index
    %c0_22 = arith.constant 0 : index
    %24 = vector.load %arg10[%c1_21, %c0_22] : memref<10x128xbf16, #tpu.memory_space<vmem>>, vector<8x128xbf16>
    tpu.vector_store %arg10[%c1_21, %c0_22], %23 {strides = array<i32>} : memref<10x128xbf16, #tpu.memory_space<vmem>>, vector<8x128xbf16>,
    %c0_23 = arith.constant 0 : index
    %c0_24 = arith.constant 0 : index
    %25 = vector.load %arg10[%c0_23, %c0_24] : memref<10x128xbf16, #tpu.memory_space<vmem>>, vector<8x128xbf16>
    %c0_25 = arith.constant 0 : index
    %c0_26 = arith.constant 0 : index
    %c0_27 = arith.constant 0 : index
    %26 = vector.load %arg6[%c0_25, %c0_26, %c0_27] : memref<3x128x128xbf16, #tpu.memory_space<vmem>>, vector<1x128x128xbf16>
    %27 = vector.shape_cast %26 : vector<1x128x128xbf16> to vector<128x128xbf16>
    %cst_28 = arith.constant dense<0.000000e+00> : vector<8x128xf32>
    %28 = tpu.matmul %25, %27, %cst_28 {dimension_numbers = #tpu.dot_dimension_numbers<[1], [0], [0], [1], [0, 0, 1, 1], [], []>} : vector<8x128xbf16>, vector<128x128xbf16>, vector<8x128xf32> -> vector<8x128xf32>
    %c1_29 = arith.constant 1 : index
    %c0_30 = arith.constant 0 : index
    %29 = vector.load %arg10[%c1_29, %c0_30] : memref<10x128xbf16, #tpu.memory_space<vmem>>, vector<8x128xbf16>
    %c1_31 = arith.constant 1 : index
    %c0_32 = arith.constant 0 : index
    %c0_33 = arith.constant 0 : index
    %30 = vector.load %arg6[%c1_31, %c0_32, %c0_33] : memref<3x128x128xbf16, #tpu.memory_space<vmem>>, vector<1x128x128xbf16>
    %31 = vector.shape_cast %30 : vector<1x128x128xbf16> to vector<128x128xbf16>
    %cst_34 = arith.constant dense<0.000000e+00> : vector<8x128xf32>
    %32 = tpu.matmul %29, %31, %cst_34 {dimension_numbers = #tpu.dot_dimension_numbers<[1], [0], [0], [1], [0, 0, 1, 1], [], []>} : vector<8x128xbf16>, vector<128x128xbf16>, vector<8x128xf32> -> vector<8x128xf32>
    %33 = arith.addf %28, %32 : vector<8x128xf32>
    %c2 = arith.constant 2 : index
    %c0_35 = arith.constant 0 : index
    %34 = vector.load %arg10[%c2, %c0_35] : memref<10x128xbf16, #tpu.memory_space<vmem>>, vector<8x128xbf16>
    %c2_36 = arith.constant 2 : index
    %c0_37 = arith.constant 0 : index
    %c0_38 = arith.constant 0 : index
    %35 = vector.load %arg6[%c2_36, %c0_37, %c0_38] : memref<3x128x128xbf16, #tpu.memory_space<vmem>>, vector<1x128x128xbf16>
    %36 = vector.shape_cast %35 : vector<1x128x128xbf16> to vector<128x128xbf16>
    %cst_39 = arith.constant dense<0.000000e+00> : vector<8x128xf32>
    %37 = tpu.matmul %34, %36, %cst_39 {dimension_numbers = #tpu.dot_dimension_numbers<[1], [0], [0], [1], [0, 0, 1, 1], [], []>} : vector<8x128xbf16>, vector<128x128xbf16>, vector<8x128xf32> -> vector<8x128xf32>
    %38 = arith.addf %33, %37 : vector<8x128xf32>
    %c0_40 = arith.constant 0 : index
    %c0_41 = arith.constant 0 : index
    %39 = vector.load %arg7[%c0_40, %c0_41] : memref<1x128xf32, #tpu.memory_space<vmem>>, vector<1x128xf32>
    %40 = vector.broadcast %39 : vector<1x128xf32> to vector<8x128xf32>
    %41 = arith.mulf %38, %40 : vector<8x128xf32>
    %c0_42 = arith.constant 0 : index
    %c0_43 = arith.constant 0 : index
    %42 = vector.load %arg8[%c0_42, %c0_43] : memref<1x128xf32, #tpu.memory_space<vmem>>, vector<1x128xf32>
    %43 = vector.broadcast %42 : vector<1x128xf32> to vector<8x128xf32>
    %44 = arith.addf %41, %43 : vector<8x128xf32>
    %c0_44 = arith.constant 0 : index
    %c0_45 = arith.constant 0 : index
    %c0_46 = arith.constant 0 : index
    %45 = vector.load %arg2[%c0_44, %c0_45, %c0_46] : memref<1x8x128xf32, #tpu.memory_space<vmem>>, vector<1x8x128xf32>
    %46 = vector.shape_cast %45 : vector<1x8x128xf32> to vector<8x128xf32>
    %47 = arith.addf %44, %46 : vector<8x128xf32>
    %cst_47 = arith.constant 0.000000e+00 : f32
    %48 = vector.broadcast %cst_47 : f32 to vector<8x128xf32>
    %49 = arith.maximumf %47, %48 : vector<8x128xf32>
    %c0_48 = arith.constant 0 : index
    %c0_49 = arith.constant 0 : index
    %c0_50 = arith.constant 0 : index
    %50 = vector.load %arg9[%c0_48, %c0_49, %c0_50] : memref<1x8x128xf32, #tpu.memory_space<vmem>>, vector<1x8x128xf32>
    %51 = vector.shape_cast %50 : vector<1x8x128xf32> to vector<8x128xf32>
    %52 = vector.shape_cast %49 : vector<8x128xf32> to vector<1x8x128xf32>
    tpu.vector_store %arg9[%c0_48, %c0_49, %c0_50], %52 {strides = array<i32>} : memref<1x8x128xf32, #tpu.memory_space<vmem>>, vector<1x8x128xf32>,
    return
  }
  func.func @transform_0(%arg0: i32) -> (i32, i32, i32) {
    %c0_i32 = arith.constant 0 : i32
    %c0_i32_0 = arith.constant 0 : i32
    %c0_i32_1 = arith.constant 0 : i32
    return %arg0, %c0_i32, %c0_i32_0 : i32, i32, i32
  }
  func.func @transform_1(%arg0: i32) -> (i32, i32, i32) {
    %c0_i32 = arith.constant 0 : i32
    %c0_i32_0 = arith.constant 0 : i32
    %c0_i32_1 = arith.constant 0 : i32
    return %arg0, %c0_i32, %c0_i32_0 : i32, i32, i32
  }
  func.func @transform_2(%arg0: i32) -> (i32, i32, i32) {
    %c0_i32 = arith.constant 0 : i32
    %c0_i32_0 = arith.constant 0 : i32
    %c0_i32_1 = arith.constant 0 : i32
    %c0_i32_2 = arith.constant 0 : i32
    return %c0_i32, %c0_i32_0, %c0_i32_1 : i32, i32, i32
  }
  func.func @transform_3(%arg0: i32) -> (i32, i32) {
    %c0_i32 = arith.constant 0 : i32
    %c0_i32_0 = arith.constant 0 : i32
    %c0_i32_1 = arith.constant 0 : i32
    return %c0_i32, %c0_i32_0 : i32, i32
  }
  func.func @transform_4(%arg0: i32) -> (i32, i32) {
    %c0_i32 = arith.constant 0 : i32
    %c0_i32_0 = arith.constant 0 : i32
    %c0_i32_1 = arith.constant 0 : i32
    return %c0_i32, %c0_i32_0 : i32, i32
  }
  func.func @transform_5(%arg0: i32) -> (i32, i32, i32) {
    %c0_i32 = arith.constant 0 : i32
    %c0_i32_0 = arith.constant 0 : i32
    %c0_i32_1 = arith.constant 0 : i32
    %c0_i32_2 = arith.constant 0 : i32
    return %c0_i32, %c0_i32_0, %c0_i32_1 : i32, i32, i32
  }
  func.func @transform_6(%arg0: i32) -> (i32, i32) {
    %c0_i32 = arith.constant 0 : i32
    %c0_i32_0 = arith.constant 0 : i32
    %c0_i32_1 = arith.constant 0 : i32
    return %c0_i32, %c0_i32_0 : i32, i32
  }
  func.func @transform_7(%arg0: i32) -> (i32, i32) {
    %c0_i32 = arith.constant 0 : i32
    %c0_i32_0 = arith.constant 0 : i32
    %c0_i32_1 = arith.constant 0 : i32
    return %c0_i32, %c0_i32_0 : i32, i32
  }
  func.func @transform_8(%arg0: i32) -> (i32, i32, i32) {
    %c0_i32 = arith.constant 0 : i32
    %c0_i32_0 = arith.constant 0 : i32
    %c0_i32_1 = arith.constant 0 : i32
    return %arg0, %c0_i32, %c0_i32_0 : i32, i32, i32
  }
}

</mosaic_0001>

<llo_original>
// kernel: tpu_custom_call.1
$region0: #{tpu_custom_call.1}
  #allocation0 [shape = 'u32[]', space=smem, size = 0x4, offset = 0x4, fixed_abs, tag = 'smem constant byte address 0x4 - core index']
  #allocation1 [shape = 'u32[144,128]{1,0:T(1,128)}', space=vmem, size = 0x12000, scoped, tag = 'internal scratch']
  #allocation2 [shape = 'bf16[10,128]{1,0:T(8,128)(2,1)}', space=vmem, size = 0x1000, scoped, tag = 'scratch operand']
  %s0 = inlined_call_operand.vmem [shape: bf16[2,9,128], index: 0, kind: input, shape index: {}]
  %s1 = inlined_call_operand.vmem [shape: f32[2,8,128], index: 1, kind: input, shape index: {}]
  %s2 = inlined_call_operand.hbm [shape: bf16[2,128,128], index: 2, kind: input, shape index: {}]
  %s3 = inlined_call_operand.vmem [shape: f32[1,128], index: 3, kind: input, shape index: {}]
  %s4 = inlined_call_operand.vmem [shape: f32[1,128], index: 4, kind: input, shape index: {}]
  %s5 = inlined_call_operand.hbm [shape: bf16[3,128,128], index: 5, kind: input, shape index: {}]
  %s6 = inlined_call_operand.vmem [shape: f32[1,128], index: 6, kind: input, shape index: {}]
  %s7 = inlined_call_operand.vmem [shape: f32[1,128], index: 7, kind: input, shape index: {}]
  %s8 = inlined_call_operand.hbm [shape: f32[2,8,128], index: 8, kind: output, shape index: {}]
  %s9 = sld [smem:[#allocation0]]
  $region73: #{tpu_custom_call.1} parent=0
    _
  %s11 = ssub.s32 1, %s9
  %s12 = scalar_select 0, %s11, %s9
  $region1: #{tpu_custom_call.1} parent=0
    #allocation3 [shape = 'u8[65536]{0}', space=vmem, size = 0x10000, scoped, tag = 'input window, operand 2, single buffered']
    #allocation4 [shape = 's32[2]{0}', space=sflag, size = 0x8, scoped, tag = 'scoped memory for tpu_custom_call.1']
    #allocation5 [shape = 's32[2]{0}', space=sflag, size = 0x8, scoped, tag = 'scoped memory for tpu_custom_call.1']
    #allocation6 [shape = 'u8[98304]{0}', space=vmem, size = 0x18000, scoped, tag = 'input window, operand 5, single buffered']
    #allocation7 [shape = 's32[1]{0}', space=sflag, size = 0x4, scoped, tag = 'scoped memory for tpu_custom_call.1']
    #allocation8 [shape = 'u8[8192]{0}', space=vmem, size = 0x2000, scoped, tag = 'output window, operand 0']
    %13 = vsyncpa [#allocation4], 0
    %14 = vsyncpa [#allocation7], 0
    %15 = vsyncpa [#allocation5], 0
    %s16 = scalar_lea.sflag [#allocation5], 1
    %17 = vsyncpa %s16, 0
    loop: start=0, step=1, limit=4
    $region2: #{tpu_custom_call.1} parent=1 // loop_pre_header
      _
    $region3: #{tpu_custom_call.1} parent=1 // loop_header
      %s19 = sphi 0, %s23
      %p20 = scmp.ge.s32.totalorder %s19, 4
      %s29 = sphi 0, %s31
      %s32 = sphi 0, %s29
      %s33 = sphi 0, %s32
      %s49 = sphi 0, %s33
      %s55 = sphi 0, %s57
      %s58 = sphi 0, %s55
      %s59 = sphi 0, %s58
      %s75 = sphi 0, %s59
      %s79 = sphi 0, %s79
      %s81 = sphi 0, %s79
      %s82 = sphi 0, %s81
      %s96 = sphi 0, %s82
      %s100 = sphi 0, %s100
      %s102 = sphi 0, %s100
      %s103 = sphi 0, %s102
      %s117 = sphi 0, %s103
      %s121 = sphi 0, %s121
      %s123 = sphi 0, %s121
      %s124 = sphi 0, %s123
      %s138 = sphi 0, %s124
      %s142 = sphi 0, %s142
      %s144 = sphi 0, %s142
      %s145 = sphi 0, %s144
      %s159 = sphi 0, %s145
      %s163 = sphi 0, %s163
      %s165 = sphi 0, %s163
      %s166 = sphi 0, %s165
      %s180 = sphi 0, %s166
      %s184 = sphi 0, %s184
      %s186 = sphi 0, %s184
      %s187 = sphi 0, %s186
      %s201 = sphi 0, %s187
      %s207 = sphi 0, %s209
      %s210 = sphi 0, %s207
      %s211 = sphi 0, %s210
      %s227 = sphi 0, %s211
    $region4: #{tpu_custom_call.1} parent=1 // loop_header_branch
      %22 = sbr.rel (%p20) target = $region8
    $region5: #{tpu_custom_call.1} parent=1 // loop_body
      %s24 = ssub.s32 %s19, 1
      %s25 = ssub.s32 %s19, 2
      %s26 = sadd.s32 %s19, 1
      %s27 = ssub.s32 %s19, %s26
      %p28 = scmp.eq.s32.totalorder %s27, 0
      %s30 = sadd.s32 %s29, 1
      %s31 = scalar_select %p28, %s29, %s30
      %p34 = pneg %p28
      %p35 = scmp.eq.s32.totalorder %s19, 1
      %p36 = por %p34, %p35
      %p37 = scmp.ne.s32.totalorder %s29, %s32
      %p38 = scmp.eq.s32.totalorder %s19, 0
      %p39 = por %p37, %p38
      %p40 = scmp.ne.s32.totalorder %s29, %s32
      %p41 = scmp.eq.s32.totalorder %s24, 1
      %p42 = por %p40, %p41
      %p43 = scmp.ne.s32.totalorder %s32, %s33
      %p44 = scmp.eq.s32.totalorder %s24, 0
      %p45 = por %p43, %p44
      %p46 = scmp.ne.s32.totalorder %s32, %s33
      %p47 = scmp.eq.s32.totalorder %s25, 1
      %p48 = por %p46, %p47
      %p50 = scmp.ne.s32.totalorder %s33, %s49
      %p51 = scmp.eq.s32.totalorder %s25, 0
      %p52 = por %p50, %p51
      %s53 = ssub.s32 %s19, %s26
      %p54 = scmp.eq.s32.totalorder %s53, 0
      %s56 = sadd.s32 %s55, 1
      %s57 = scalar_select %p54, %s55, %s56
      %p60 = pneg %p54
      %p61 = scmp.eq.s32.totalorder %s19, 1
      %p62 = por %p60, %p61
      %p63 = scmp.ne.s32.totalorder %s55, %s58
      %p64 = scmp.eq.s32.totalorder %s19, 0
      %p65 = por %p63, %p64
      %p66 = scmp.ne.s32.totalorder %s55, %s58
      %p67 = scmp.eq.s32.totalorder %s24, 1
      %p68 = por %p66, %p67
      %p69 = scmp.ne.s32.totalorder %s58, %s59
      %p70 = scmp.eq.s32.totalorder %s24, 0
      %p71 = por %p69, %p70
      %p72 = scmp.ne.s32.totalorder %s58, %s59
      %p73 = scmp.eq.s32.totalorder %s25, 1
      %p74 = por %p72, %p73
      %p76 = scmp.ne.s32.totalorder %s59, %s75
      %p77 = scmp.eq.s32.totalorder %s25, 0
      %p78 = por %p76, %p77
      %s80 = sadd.s32 %s79, 1
      %p83 = scmp.eq.s32.totalorder %s19, 1
      %p84 = scmp.ne.s32.totalorder %s79, %s81
      %p85 = scmp.eq.s32.totalorder %s19, 0
      %p86 = por %p84, %p85
      %p87 = scmp.ne.s32.totalorder %s79, %s81
      %p88 = scmp.eq.s32.totalorder %s24, 1
      %p89 = por %p87, %p88
      %p90 = scmp.ne.s32.totalorder %s81, %s82
      %p91 = scmp.eq.s32.totalorder %s24, 0
      %p92 = por %p90, %p91
      %p93 = scmp.ne.s32.totalorder %s81, %s82
      %p94 = scmp.eq.s32.totalorder %s25, 1
      %p95 = por %p93, %p94
      %p97 = scmp.ne.s32.totalorder %s82, %s96
      %p98 = scmp.eq.s32.totalorder %s25, 0
      %p99 = por %p97, %p98
      %s101 = sadd.s32 %s100, 1
      %p104 = scmp.eq.s32.totalorder %s19, 1
      %p105 = scmp.ne.s32.totalorder %s100, %s102
      %p106 = scmp.eq.s32.totalorder %s19, 0
      %p107 = por %p105, %p106
      %p108 = scmp.ne.s32.totalorder %s100, %s102
      %p109 = scmp.eq.s32.totalorder %s24, 1
      %p110 = por %p108, %p109
      %p111 = scmp.ne.s32.totalorder %s102, %s103
      %p112 = scmp.eq.s32.totalorder %s24, 0
      %p113 = por %p111, %p112
      %p114 = scmp.ne.s32.totalorder %s102, %s103
      %p115 = scmp.eq.s32.totalorder %s25, 1
      %p116 = por %p114, %p115
      %p118 = scmp.ne.s32.totalorder %s103, %s117
      %p119 = scmp.eq.s32.totalorder %s25, 0
      %p120 = por %p118, %p119
      %s122 = sadd.s32 %s121, 1
      %p125 = scmp.eq.s32.totalorder %s19, 1
      %p126 = scmp.ne.s32.totalorder %s121, %s123
      %p127 = scmp.eq.s32.totalorder %s19, 0
      %p128 = por %p126, %p127
      %p129 = scmp.ne.s32.totalorder %s121, %s123
      %p130 = scmp.eq.s32.totalorder %s24, 1
      %p131 = por %p129, %p130
      %p132 = scmp.ne.s32.totalorder %s123, %s124
      %p133 = scmp.eq.s32.totalorder %s24, 0
      %p134 = por %p132, %p133
      %p135 = scmp.ne.s32.totalorder %s123, %s124
      %p136 = scmp.eq.s32.totalorder %s25, 1
      %p137 = por %p135, %p136
      %p139 = scmp.ne.s32.totalorder %s124, %s138
      %p140 = scmp.eq.s32.totalorder %s25, 0
      %p141 = por %p139, %p140
      %s143 = sadd.s32 %s142, 1
      %p146 = scmp.eq.s32.totalorder %s19, 1
      %p147 = scmp.ne.s32.totalorder %s142, %s144
      %p148 = scmp.eq.s32.totalorder %s19, 0
      %p149 = por %p147, %p148
      %p150 = scmp.ne.s32.totalorder %s142, %s144
      %p151 = scmp.eq.s32.totalorder %s24, 1
      %p152 = por %p150, %p151
      %p153 = scmp.ne.s32.totalorder %s144, %s145
      %p154 = scmp.eq.s32.totalorder %s24, 0
      %p155 = por %p153, %p154
      %p156 = scmp.ne.s32.totalorder %s144, %s145
      %p157 = scmp.eq.s32.totalorder %s25, 1
      %p158 = por %p156, %p157
      %p160 = scmp.ne.s32.totalorder %s145, %s159
      %p161 = scmp.eq.s32.totalorder %s25, 0
      %p162 = por %p160, %p161
      %s164 = sadd.s32 %s163, 1
      %p167 = scmp.eq.s32.totalorder %s19, 1
      %p168 = scmp.ne.s32.totalorder %s163, %s165
      %p169 = scmp.eq.s32.totalorder %s19, 0
      %p170 = por %p168, %p169
      %p171 = scmp.ne.s32.totalorder %s163, %s165
      %p172 = scmp.eq.s32.totalorder %s24, 1
      %p173 = por %p171, %p172
      %p174 = scmp.ne.s32.totalorder %s165, %s166
      %p175 = scmp.eq.s32.totalorder %s24, 0
      %p176 = por %p174, %p175
      %p177 = scmp.ne.s32.totalorder %s165, %s166
      %p178 = scmp.eq.s32.totalorder %s25, 1
      %p179 = por %p177, %p178
      %p181 = scmp.ne.s32.totalorder %s166, %s180
      %p182 = scmp.eq.s32.totalorder %s25, 0
      %p183 = por %p181, %p182
      %s185 = sadd.s32 %s184, 1
      %p188 = scmp.eq.s32.totalorder %s19, 1
      %p189 = scmp.ne.s32.totalorder %s184, %s186
      %p190 = scmp.eq.s32.totalorder %s19, 0
      %p191 = por %p189, %p190
      %p192 = scmp.ne.s32.totalorder %s184, %s186
      %p193 = scmp.eq.s32.totalorder %s24, 1
      %p194 = por %p192, %p193
      %p195 = scmp.ne.s32.totalorder %s186, %s187
      %p196 = scmp.eq.s32.totalorder %s24, 0
      %p197 = por %p195, %p196
      %p198 = scmp.ne.s32.totalorder %s186, %s187
      %p199 = scmp.eq.s32.totalorder %s25, 1
      %p200 = por %p198, %p199
      %p202 = scmp.ne.s32.totalorder %s187, %s201
      %p203 = scmp.eq.s32.totalorder %s25, 0
      %p204 = por %p202, %p203
      %s205 = ssub.s32 %s19, %s26
      %p206 = scmp.eq.s32.totalorder %s205, 0
      %s208 = sadd.s32 %s207, 1
      %s209 = scalar_select %p206, %s207, %s208
      %p212 = pneg %p206
      %p213 = scmp.eq.s32.totalorder %s19, 1
      %p214 = por %p212, %p213
      %p215 = scmp.ne.s32.totalorder %s207, %s210
      %p216 = scmp.eq.s32.totalorder %s19, 0
      %p217 = por %p215, %p216
      %p218 = scmp.ne.s32.totalorder %s207, %s210
      %p219 = scmp.eq.s32.totalorder %s24, 1
      %p220 = por %p218, %p219
      %p221 = scmp.ne.s32.totalorder %s210, %s211
      %p222 = scmp.eq.s32.totalorder %s24, 0
      %p223 = por %p221, %p222
      %p224 = scmp.ne.s32.totalorder %s210, %s211
      %p225 = scmp.eq.s32.totalorder %s25, 1
      %p226 = por %p224, %p225
      %p228 = scmp.ne.s32.totalorder %s211, %s227
      %p229 = scmp.eq.s32.totalorder %s25, 0
      %p230 = por %p228, %p229
      %p231 = scmp.le.s32.totalorder 1, %s19
      %p232 = scmp.lt.s32.totalorder %s19, 3
      %p233 = pnand %p231, %p232
      %p234 = pneg %p233
      // Predicated region
      $region9: #{tpu_custom_call.1} parent=5 // pred_check
        _
      $region10: #{tpu_custom_call.1} parent=5 // pred_check_branch
        %236 = sbr.rel (%p233) target = $region12
      $region11: #{tpu_custom_call.1} parent=5 // pred_region
        %s237 = ssub.s32 %s19, 1
        // Predicated region
        $region13: #{tpu_custom_call.1} parent=11 // pred_check
          %p238 = pneg %p92
        $region14: #{tpu_custom_call.1} parent=11 // pred_check_branch
          %240 = sbr.rel (%p238) target = $region16
        $region15: #{tpu_custom_call.1} parent=11 // pred_region
          %s242 = ssub.s32 2048, 2048
          %243 = vsyncadd [#allocation4], %s242
          %s244 = sshll.u32 [#allocation3], 4
          %s245 = int_to_ptr.vmem [resolvable:$true] %s244
          %250 = dma.hbm_to_vmem [thread:$0]  %s2, 2048, %s245, [#allocation4], 64, 64, 4
        $region16: #{tpu_custom_call.1} parent=11 // pred_fallthru
          _
        // Predicated region
        $region17: #{tpu_custom_call.1} parent=11 // pred_check
          %p251 = pneg %p113
        $region18: #{tpu_custom_call.1} parent=11 // pred_check_branch
          %253 = sbr.rel (%p251) target = $region20
        $region19: #{tpu_custom_call.1} parent=11 // pred_region
          _
        $region20: #{tpu_custom_call.1} parent=11 // pred_fallthru
          _
        // Predicated region
        $region21: #{tpu_custom_call.1} parent=11 // pred_check
          %p254 = pneg %p134
        $region22: #{tpu_custom_call.1} parent=11 // pred_check_branch
          %256 = sbr.rel (%p254) target = $region24
        $region23: #{tpu_custom_call.1} parent=11 // pred_region
          _
        $region24: #{tpu_custom_call.1} parent=11 // pred_fallthru
          _
        // Predicated region
        $region25: #{tpu_custom_call.1} parent=11 // pred_check
          %p257 = pneg %p155
        $region26: #{tpu_custom_call.1} parent=11 // pred_check_branch
          %259 = sbr.rel (%p257) target = $region28
        $region27: #{tpu_custom_call.1} parent=11 // pred_region
          %s261 = ssub.s32 3072, 3072
          %262 = vsyncadd [#allocation7], %s261
          %s263 = sshll.u32 [#allocation6], 4
          %s264 = int_to_ptr.vmem [resolvable:$true] %s263
          %269 = dma.hbm_to_vmem [thread:$0]  %s5, 3072, %s264, [#allocation7], 64, 64, 4
        $region28: #{tpu_custom_call.1} parent=11 // pred_fallthru
          _
        // Predicated region
        $region29: #{tpu_custom_call.1} parent=11 // pred_check
          %p270 = pneg %p176
        $region30: #{tpu_custom_call.1} parent=11 // pred_check_branch
          %272 = sbr.rel (%p270) target = $region32
        $region31: #{tpu_custom_call.1} parent=11 // pred_region
          _
        $region32: #{tpu_custom_call.1} parent=11 // pred_fallthru
          _
        // Predicated region
        $region33: #{tpu_custom_call.1} parent=11 // pred_check
          %p273 = pneg %p197
        $region34: #{tpu_custom_call.1} parent=11 // pred_check_branch
          %275 = sbr.rel (%p273) target = $region36
        $region35: #{tpu_custom_call.1} parent=11 // pred_region
          _
        $region36: #{tpu_custom_call.1} parent=11 // pred_fallthru
          _
      $region12: #{tpu_custom_call.1} parent=5 // pred_fallthru
        _
      %p276 = scmp.lt.s32.totalorder %s19, 2
      // Predicated region
      $region37: #{tpu_custom_call.1} parent=5 // pred_check
        %p277 = pneg %p276
      $region38: #{tpu_custom_call.1} parent=5 // pred_check_branch
        %279 = sbr.rel (%p277) target = $region40
      $region39: #{tpu_custom_call.1} parent=5 // pred_region
        // Predicated region
        $region41: #{tpu_custom_call.1} parent=39 // pred_check
          %p280 = pneg %p39
        $region42: #{tpu_custom_call.1} parent=39 // pred_check_branch
          %282 = sbr.rel (%p280) target = $region44
        $region43: #{tpu_custom_call.1} parent=39 // pred_region
          %p283 = scmp.lt.s32.totalorder %s19, 1
          %s284 = scalar_select %p283, %s19, 1
          %s285 = smul.addr %s284, 2
          %s286 = smul.addr %s285, 4
          %s287 = scalar_lea.vmem %s0, %s286
        $region44: #{tpu_custom_call.1} parent=39 // pred_fallthru
          _
        // Predicated region
        $region45: #{tpu_custom_call.1} parent=39 // pred_check
          %p288 = pneg %p65
        $region46: #{tpu_custom_call.1} parent=39 // pred_check_branch
          %290 = sbr.rel (%p288) target = $region48
        $region47: #{tpu_custom_call.1} parent=39 // pred_region
          %p291 = scmp.lt.s32.totalorder %s19, 1
          %s292 = scalar_select %p291, %s19, 1
          %s293 = smul.addr %s292, 8
          %s294 = scalar_lea.vmem %s1, %s293
        $region48: #{tpu_custom_call.1} parent=39 // pred_fallthru
          _
      $region40: #{tpu_custom_call.1} parent=5 // pred_fallthru
        _
      %p295 = scmp.le.s32.totalorder 1, %s19
      %p296 = scmp.lt.s32.totalorder %s19, 3
      %p297 = pnand %p295, %p296
      %p298 = pneg %p297
      // Predicated region
      $region49: #{tpu_custom_call.1} parent=5 // pred_check
        _
      $region50: #{tpu_custom_call.1} parent=5 // pred_check_branch
        %300 = sbr.rel (%p297) target = $region52
      $region51: #{tpu_custom_call.1} parent=5 // pred_region
        %s301 = ssub.s32 %s19, 1
        // Predicated region
        $region53: #{tpu_custom_call.1} parent=51 // pred_check
          %p302 = pneg %p92
        $region54: #{tpu_custom_call.1} parent=51 // pred_check_branch
          %304 = sbr.rel (%p302) target = $region56
        $region55: #{tpu_custom_call.1} parent=51 // pred_region
          %305 = dma.done [#allocation4], 2048
        $region56: #{tpu_custom_call.1} parent=51 // pred_fallthru
          _
        // Predicated region
        $region57: #{tpu_custom_call.1} parent=51 // pred_check
          %p306 = pneg %p155
        $region58: #{tpu_custom_call.1} parent=51 // pred_check_branch
          %308 = sbr.rel (%p306) target = $region60
        $region59: #{tpu_custom_call.1} parent=51 // pred_region
          %309 = dma.done [#allocation7], 3072
        $region60: #{tpu_custom_call.1} parent=51 // pred_fallthru
          _
        %p310 = scmp.lt.s32.totalorder %s24, 1
        %s311 = scalar_select %p310, %s24, 1
        %s312 = smul.addr %s311, 2
        %s313 = smul.addr %s312, 4
        %s314 = scalar_lea.vmem %s0, %s313
        %p315 = pneg %p45
        %p316 = pneg %p42
        %p317 = scmp.lt.s32.totalorder %s24, 1
        %s318 = scalar_select %p317, %s24, 1
        %s319 = smul.addr %s318, 8
        %s320 = scalar_lea.vmem %s1, %s319
        %p321 = pneg %p71
        %p322 = pneg %p68
        %p323 = pneg %p92
        %p324 = pneg %p89
        %p325 = pneg %p113
        %p326 = pneg %p110
        %p327 = pneg %p134
        %p328 = pneg %p131
        %p329 = pneg %p155
        %p330 = pneg %p152
        %p331 = pneg %p176
        %p332 = pneg %p173
        %p333 = pneg %p197
        %p334 = pneg %p194
        %p335 = pneg %p223
        %p336 = pneg %p220
        %s337 = sand.u32 %s210, 1
        %s338 = scalar_lea.sflag [#allocation5], %s337
        %s339 = sand.u32 %s210, 1
        %s340 = smul.addr %s339, 8
        %s341 = scalar_lea.vmem [#allocation8], %s340
        %p342 = scmp.lt.s32.totalorder %s24, 1
        %s343 = scalar_select %p342, %s24, 1
        %s344 = smul.addr %s343, 2
        %s345 = smul.addr %s344, 4
        %s346 = scalar_lea.vmem %s0, %s345
        %p347 = scmp.lt.s32.totalorder %s24, 1
        %s348 = scalar_select %p347, %s24, 1
        %s349 = smul.addr %s348, 8
        %s350 = scalar_lea.vmem %s1, %s349
        %vm352 = vcmask 1040384
        %vm353 = vsmask.f32 256
        %vm354 = vmand %vm352, %vm353
        %v355 = vld [vmem:[#allocation2] sm:$0x1]
        %v356 = vsel %vm354, 0, %v355
        %357 = vst [vmem:[#allocation2] sm:$0x1] %v356
        %vm358 = vsmask.f32 7938
        %vm359 = vmand %vm352, %vm358
        %v360 = vld [vmem:[#allocation2 + $0x4] sm:$0x1]
        %v361 = vsel %vm359, 0, %v360
        %362 = vst [vmem:[#allocation2 + $0x4] sm:$0x1] %v361
        %v363 = vld [vmem:[%s346] sm:$0xf]
        %v364 = vld [vmem:[#allocation3] sm:$0xf]
        %v365 = vld [vmem:[#allocation3 + $0x4] sm:$0xf]
        %v366 = vld [vmem:[#allocation3 + $0x8] sm:$0xf]
        %v367 = vld [vmem:[#allocation3 + $0xc] sm:$0xf]
        %v368 = vld [vmem:[#allocation3 + $0x10] sm:$0xf]
        %v369 = vld [vmem:[#allocation3 + $0x14] sm:$0xf]
        %v370 = vld [vmem:[#allocation3 + $0x18] sm:$0xf]
        %v371 = vld [vmem:[#allocation3 + $0x1c] sm:$0xf]
        %v372 = vld [vmem:[#allocation3 + $0x20] sm:$0xf]
        %v373 = vld [vmem:[#allocation3 + $0x24] sm:$0xf]
        %v374 = vld [vmem:[#allocation3 + $0x28] sm:$0xf]
        %v375 = vld [vmem:[#allocation3 + $0x2c] sm:$0xf]
        %v376 = vld [vmem:[#allocation3 + $0x30] sm:$0xf]
        %v377 = vld [vmem:[#allocation3 + $0x34] sm:$0xf]
        %v378 = vld [vmem:[#allocation3 + $0x38] sm:$0xf]
        %v379 = vld [vmem:[#allocation3 + $0x3c] sm:$0xf]
        %v380 = vld [vmem:[%s346 + $0x4] sm:$0x1]
        %s381 = scalar_lea.vmem [#allocation3], 64
        %v382 = vld [vmem:[%s381] sm:$0xf]
        %v383 = vld [vmem:[%s381 + $0x4] sm:$0xf]
        %v384 = vld [vmem:[%s381 + $0x8] sm:$0xf]
        %v385 = vld [vmem:[%s381 + $0xc] sm:$0xf]
        %v386 = vld [vmem:[%s381 + $0x10] sm:$0xf]
        %v387 = vld [vmem:[%s381 + $0x14] sm:$0xf]
        %v388 = vld [vmem:[%s381 + $0x18] sm:$0xf]
        %v389 = vld [vmem:[%s381 + $0x1c] sm:$0xf]
        %v390 = vld [vmem:[%s381 + $0x20] sm:$0xf]
        %v391 = vld [vmem:[%s381 + $0x24] sm:$0xf]
        %v392 = vld [vmem:[%s381 + $0x28] sm:$0xf]
        %v393 = vld [vmem:[%s381 + $0x2c] sm:$0xf]
        %v394 = vld [vmem:[%s381 + $0x30] sm:$0xf]
        %v395 = vld [vmem:[%s381 + $0x34] sm:$0xf]
        %v396 = vld [vmem:[%s381 + $0x38] sm:$0xf]
        %v397 = vld [vmem:[%s381 + $0x3c] sm:$0xf]
        %v400 = vunpack.c.l.b16 %v363
        %v401 = vunpack.c.l.b16 %v380
        %v402 = vpack.c.b16 %v401, %v400
        %v404 = vshrl.u32 %v402, 16
        %v406 = vshll.u32 %v402, 16
        %v408 = vrot.slane %v406, 1
        %v409 = vor.u32 %v404, %v408
        %v427 = vunpack.c.l.b16 %v382
        %v428 = vunpack.c.l.b16 %v383
        %v429 = vunpack.c.l.b16 %v384
        %v430 = vunpack.c.l.b16 %v385
        %v431 = vunpack.c.l.b16 %v386
        %v432 = vunpack.c.l.b16 %v387
        %v433 = vunpack.c.l.b16 %v388
        %v434 = vunpack.c.l.b16 %v389
        %v435 = vunpack.c.l.b16 %v390
        %v436 = vunpack.c.l.b16 %v391
        %v437 = vunpack.c.l.b16 %v392
        %v438 = vunpack.c.l.b16 %v393
        %v439 = vunpack.c.l.b16 %v394
        %v440 = vunpack.c.l.b16 %v395
        %v441 = vunpack.c.l.b16 %v396
        %v442 = vunpack.c.l.b16 %v397
        %v443 = vpack.c.b16 %v428, %v427
        %v444 = vpack.c.b16 %v430, %v429
        %v445 = vpack.c.b16 %v432, %v431
        %v446 = vpack.c.b16 %v434, %v433
        %v447 = vpack.c.b16 %v436, %v435
        %v448 = vpack.c.b16 %v438, %v437
        %v449 = vpack.c.b16 %v440, %v439
        %v450 = vpack.c.b16 %v442, %v441
        %459 = vmatprep.subr.bf16.mxu0 0
        %460 = vmatpush1.bf16.msra.mxu0 %v450
        %461 = vmatprep.subr.bf16.mxu0 0
        %462 = vmatpush1.bf16.msra.mxu0 %v449
        %463 = vmatprep.subr.bf16.mxu0 0
        %464 = vmatpush1.bf16.msra.mxu0 %v448
        %465 = vmatprep.subr.bf16.mxu0 0
        %466 = vmatpush1.bf16.msra.mxu0 %v447
        %467 = vmatprep.subr.bf16.mxu0 0
        %468 = vmatpush1.bf16.msra.mxu0 %v446
        %469 = vmatprep.subr.bf16.mxu0 0
        %470 = vmatpush1.bf16.msra.mxu0 %v445
        %471 = vmatprep.subr.bf16.mxu0 0
        %472 = vmatpush1.bf16.msra.mxu0 %v444
        %473 = vmatprep.subr.bf16.mxu0 0
        %474 = vmatpush1.bf16.msra.mxu0 %v443
        %475 = vmatprep.subr.bf16.mxu0 0
        %476 = vmatpush2.bf16.msra.mxu0 0
        %477 = vmatprep.subr.bf16.mxu0 0
        %478 = vmatpush2.bf16.msra.mxu0 0
        %479 = vmatprep.subr.bf16.mxu0 0
        %480 = vmatpush2.bf16.msra.mxu0 0
        %481 = vmatprep.subr.bf16.mxu0 0
        %482 = vmatpush2.bf16.msra.mxu0 0
        %483 = vmatprep.subr.bf16.mxu0 0
        %484 = vmatpush2.bf16.msra.mxu0 0
        %485 = vmatprep.subr.bf16.mxu0 0
        %486 = vmatpush2.bf16.msra.mxu0 0
        %487 = vmatprep.subr.bf16.mxu0 0
        %488 = vmatpush2.bf16.msra.mxu0 0
        %489 = vmatprep.subr.bf16.mxu0 0
        %490 = vmatpush2.bf16.msra.mxu0 0
        %491 = vmatprep.mubr.bf16.mxu0 0
        %492 = vmatmul.mubr.bf16.gmra.mxu0 %v409
        %v493 = vpop.f32.mrf.mxu0
        %v494 = vadd.f32 0.0, %v493
        %v495 = vpop.f32.mrf.mxu0
        %v496 = vpop.f32.mrf.mxu0
        %v497 = vpop.f32.mrf.mxu0
        %498 = vdwg.mxu0
        %v515 = vunpack.c.l.b16 %v364
        %v516 = vunpack.c.l.b16 %v365
        %v517 = vunpack.c.l.b16 %v366
        %v518 = vunpack.c.l.b16 %v367
        %v519 = vunpack.c.l.b16 %v368
        %v520 = vunpack.c.l.b16 %v369
        %v521 = vunpack.c.l.b16 %v370
        %v522 = vunpack.c.l.b16 %v371
        %v523 = vunpack.c.l.b16 %v372
        %v524 = vunpack.c.l.b16 %v373
        %v525 = vunpack.c.l.b16 %v374
        %v526 = vunpack.c.l.b16 %v375
        %v527 = vunpack.c.l.b16 %v376
        %v528 = vunpack.c.l.b16 %v377
        %v529 = vunpack.c.l.b16 %v378
        %v530 = vunpack.c.l.b16 %v379
        %v531 = vpack.c.b16 %v516, %v515
        %v532 = vpack.c.b16 %v518, %v517
        %v533 = vpack.c.b16 %v520, %v519
        %v534 = vpack.c.b16 %v522, %v521
        %v535 = vpack.c.b16 %v524, %v523
        %v536 = vpack.c.b16 %v526, %v525
        %v537 = vpack.c.b16 %v528, %v527
        %v538 = vpack.c.b16 %v530, %v529
        %547 = vmatprep.subr.bf16.mxu0 0
        %548 = vmatpush1.bf16.msra.mxu0 %v538
        %549 = vmatprep.subr.bf16.mxu0 0
        %550 = vmatpush1.bf16.msra.mxu0 %v537
        %551 = vmatprep.subr.bf16.mxu0 0
        %552 = vmatpush1.bf16.msra.mxu0 %v536
        %553 = vmatprep.subr.bf16.mxu0 0
        %554 = vmatpush1.bf16.msra.mxu0 %v535
        %555 = vmatprep.subr.bf16.mxu0 0
        %556 = vmatpush1.bf16.msra.mxu0 %v534
        %557 = vmatprep.subr.bf16.mxu0 0
        %558 = vmatpush1.bf16.msra.mxu0 %v533
        %559 = vmatprep.subr.bf16.mxu0 0
        %560 = vmatpush1.bf16.msra.mxu0 %v532
        %561 = vmatprep.subr.bf16.mxu0 0
        %562 = vmatpush1.bf16.msra.mxu0 %v531
        %563 = vmatprep.subr.bf16.mxu0 0
        %564 = vmatpush2.bf16.msra.mxu0 0
        %565 = vmatprep.subr.bf16.mxu0 0
        %566 = vmatpush2.bf16.msra.mxu0 0
        %567 = vmatprep.subr.bf16.mxu0 0
        %568 = vmatpush2.bf16.msra.mxu0 0
        %569 = vmatprep.subr.bf16.mxu0 0
        %570 = vmatpush2.bf16.msra.mxu0 0
        %571 = vmatprep.subr.bf16.mxu0 0
        %572 = vmatpush2.bf16.msra.mxu0 0
        %573 = vmatprep.subr.bf16.mxu0 0
        %574 = vmatpush2.bf16.msra.mxu0 0
        %575 = vmatprep.subr.bf16.mxu0 0
        %576 = vmatpush2.bf16.msra.mxu0 0
        %577 = vmatprep.subr.bf16.mxu0 0
        %578 = vmatpush2.bf16.msra.mxu0 0
        %579 = vmatprep.mubr.bf16.mxu0 0
        %580 = vmatmul.mubr.bf16.gmra.mxu0 %v363
        %v581 = vpop.f32.mrf.mxu0
        %v582 = vadd.f32 %v494, %v581
        %v583 = vpop.f32.mrf.mxu0
        %v584 = vpop.f32.mrf.mxu0
        %v585 = vpop.f32.mrf.mxu0
        %586 = vdwg.mxu0
        %v587 = vld [vmem:[%s3] sm:$0x1]
        %v589 = vlaneseq
        %v590 = vshrl.u32 %v589, 7
        %v591 = vsub.s32 0, %v590
        %v592 = vrot.slane %v587, %v591
        %v594 = vmul.f32 %v582, %v592
        %v595 = vld [vmem:[%s4] sm:$0x1]
        %v597 = vlaneseq
        %v598 = vshrl.u32 %v597, 7
        %v599 = vsub.s32 0, %v598
        %v600 = vrot.slane %v595, %v599
        %v602 = vadd.f32 %v594, %v600
        %v603 = vmax.f32 %v602, 0.0
        %v604 = vpack.c.bf16 %v603, %v603
        %v606 = vunpack.c.l.b16 %v604
        %v607 = vpack.c.b16 %v606, %v606
        %v609 = vshrl.u32 %v607, 16
        %v611 = vrot.slane %v609, 7
        %v612 = vshll.u32 %v607, 16
        %v614 = vor.u32 %v611, %v612
        %v615 = vrot.slane %v611, 4
        %vm618 = vcmask 1043456
        %vm619 = vmand %vm618, %vm358
        %v620 = vld [vmem:[#allocation2] sm:$0xf]
        %v621 = vsel %vm619, %v614, %v620
        %622 = vst [vmem:[#allocation2] sm:$0xf] %v621
        %v623 = vld [vmem:[#allocation2 + $0x4] sm:$0x1]
        %v624 = vsel %vm354, %v615, %v623
        %625 = vst [vmem:[#allocation2 + $0x4] sm:$0x1] %v624
        %v626 = vld [vmem:[#allocation2] sm:$0xf]
        %v627 = vld [vmem:[#allocation6] sm:$0xf]
        %v628 = vld [vmem:[#allocation6 + $0x4] sm:$0xf]
        %v629 = vld [vmem:[#allocation6 + $0x8] sm:$0xf]
        %v630 = vld [vmem:[#allocation6 + $0xc] sm:$0xf]
        %v631 = vld [vmem:[#allocation6 + $0x10] sm:$0xf]
        %v632 = vld [vmem:[#allocation6 + $0x14] sm:$0xf]
        %v633 = vld [vmem:[#allocation6 + $0x18] sm:$0xf]
        %v634 = vld [vmem:[#allocation6 + $0x1c] sm:$0xf]
        %v635 = vld [vmem:[#allocation6 + $0x20] sm:$0xf]
        %v636 = vld [vmem:[#allocation6 + $0x24] sm:$0xf]
        %v637 = vld [vmem:[#allocation6 + $0x28] sm:$0xf]
        %v638 = vld [vmem:[#allocation6 + $0x2c] sm:$0xf]
        %v639 = vld [vmem:[#allocation6 + $0x30] sm:$0xf]
        %v640 = vld [vmem:[#allocation6 + $0x34] sm:$0xf]
        %v641 = vld [vmem:[#allocation6 + $0x38] sm:$0xf]
        %v642 = vld [vmem:[#allocation6 + $0x3c] sm:$0xf]
        %v643 = vld [vmem:[#allocation2 + $0x4] sm:$0x1]
        %s644 = scalar_lea.vmem [#allocation6], 64
        %v645 = vld [vmem:[%s644] sm:$0xf]
        %v646 = vld [vmem:[%s644 + $0x4] sm:$0xf]
        %v647 = vld [vmem:[%s644 + $0x8] sm:$0xf]
        %v648 = vld [vmem:[%s644 + $0xc] sm:$0xf]
        %v649 = vld [vmem:[%s644 + $0x10] sm:$0xf]
        %v650 = vld [vmem:[%s644 + $0x14] sm:$0xf]
        %v651 = vld [vmem:[%s644 + $0x18] sm:$0xf]
        %v652 = vld [vmem:[%s644 + $0x1c] sm:$0xf]
        %v653 = vld [vmem:[%s644 + $0x20] sm:$0xf]
        %v654 = vld [vmem:[%s644 + $0x24] sm:$0xf]
        %v655 = vld [vmem:[%s644 + $0x28] sm:$0xf]
        %v656 = vld [vmem:[%s644 + $0x2c] sm:$0xf]
        %v657 = vld [vmem:[%s644 + $0x30] sm:$0xf]
        %v658 = vld [vmem:[%s644 + $0x34] sm:$0xf]
        %v659 = vld [vmem:[%s644 + $0x38] sm:$0xf]
        %v660 = vld [vmem:[%s644 + $0x3c] sm:$0xf]
        %v663 = vunpack.c.l.b16 %v626
        %v664 = vunpack.c.l.b16 %v643
        %v665 = vpack.c.b16 %v664, %v663
        %v667 = vshrl.u32 %v665, 16
        %v669 = vshll.u32 %v665, 16
        %v671 = vrot.slane %v669, 1
        %v672 = vor.u32 %v667, %v671
        %v690 = vunpack.c.l.b16 %v645
        %v691 = vunpack.c.l.b16 %v646
        %v692 = vunpack.c.l.b16 %v647
        %v693 = vunpack.c.l.b16 %v648
        %v694 = vunpack.c.l.b16 %v649
        %v695 = vunpack.c.l.b16 %v650
        %v696 = vunpack.c.l.b16 %v651
        %v697 = vunpack.c.l.b16 %v652
        %v698 = vunpack.c.l.b16 %v653
        %v699 = vunpack.c.l.b16 %v654
        %v700 = vunpack.c.l.b16 %v655
        %v701 = vunpack.c.l.b16 %v656
        %v702 = vunpack.c.l.b16 %v657
        %v703 = vunpack.c.l.b16 %v658
        %v704 = vunpack.c.l.b16 %v659
        %v705 = vunpack.c.l.b16 %v660
        %v706 = vpack.c.b16 %v691, %v690
        %v707 = vpack.c.b16 %v693, %v692
        %v708 = vpack.c.b16 %v695, %v694
        %v709 = vpack.c.b16 %v697, %v696
        %v710 = vpack.c.b16 %v699, %v698
        %v711 = vpack.c.b16 %v701, %v700
        %v712 = vpack.c.b16 %v703, %v702
        %v713 = vpack.c.b16 %v705, %v704
        %722 = vmatprep.subr.bf16.mxu0 0
        %723 = vmatpush1.bf16.msra.mxu0 %v713
        %724 = vmatprep.subr.bf16.mxu0 0
        %725 = vmatpush1.bf16.msra.mxu0 %v712
        %726 = vmatprep.subr.bf16.mxu0 0
        %727 = vmatpush1.bf16.msra.mxu0 %v711
        %728 = vmatprep.subr.bf16.mxu0 0
        %729 = vmatpush1.bf16.msra.mxu0 %v710
        %730 = vmatprep.subr.bf16.mxu0 0
        %731 = vmatpush1.bf16.msra.mxu0 %v709
        %732 = vmatprep.subr.bf16.mxu0 0
        %733 = vmatpush1.bf16.msra.mxu0 %v708
        %734 = vmatprep.subr.bf16.mxu0 0
        %735 = vmatpush1.bf16.msra.mxu0 %v707
        %736 = vmatprep.subr.bf16.mxu0 0
        %737 = vmatpush1.bf16.msra.mxu0 %v706
        %738 = vmatprep.subr.bf16.mxu0 0
        %739 = vmatpush2.bf16.msra.mxu0 0
        %740 = vmatprep.subr.bf16.mxu0 0
        %741 = vmatpush2.bf16.msra.mxu0 0
        %742 = vmatprep.subr.bf16.mxu0 0
        %743 = vmatpush2.bf16.msra.mxu0 0
        %744 = vmatprep.subr.bf16.mxu0 0
        %745 = vmatpush2.bf16.msra.mxu0 0
        %746 = vmatprep.subr.bf16.mxu0 0
        %747 = vmatpush2.bf16.msra.mxu0 0
        %748 = vmatprep.subr.bf16.mxu0 0
        %749 = vmatpush2.bf16.msra.mxu0 0
        %750 = vmatprep.subr.bf16.mxu0 0
        %751 = vmatpush2.bf16.msra.mxu0 0
        %752 = vmatprep.subr.bf16.mxu0 0
        %753 = vmatpush2.bf16.msra.mxu0 0
        %754 = vmatprep.mubr.bf16.mxu0 0
        %755 = vmatmul.mubr.bf16.gmra.mxu0 %v672
        %v756 = vpop.f32.mrf.mxu0
        %v757 = vadd.f32 0.0, %v756
        %v758 = vpop.f32.mrf.mxu0
        %v759 = vpop.f32.mrf.mxu0
        %v760 = vpop.f32.mrf.mxu0
        %761 = vdwg.mxu0
        %v778 = vunpack.c.l.b16 %v627
        %v779 = vunpack.c.l.b16 %v628
        %v780 = vunpack.c.l.b16 %v629
        %v781 = vunpack.c.l.b16 %v630
        %v782 = vunpack.c.l.b16 %v631
        %v783 = vunpack.c.l.b16 %v632
        %v784 = vunpack.c.l.b16 %v633
        %v785 = vunpack.c.l.b16 %v634
        %v786 = vunpack.c.l.b16 %v635
        %v787 = vunpack.c.l.b16 %v636
        %v788 = vunpack.c.l.b16 %v637
        %v789 = vunpack.c.l.b16 %v638
        %v790 = vunpack.c.l.b16 %v639
        %v791 = vunpack.c.l.b16 %v640
        %v792 = vunpack.c.l.b16 %v641
        %v793 = vunpack.c.l.b16 %v642
        %v794 = vpack.c.b16 %v779, %v778
        %v795 = vpack.c.b16 %v781, %v780
        %v796 = vpack.c.b16 %v783, %v782
        %v797 = vpack.c.b16 %v785, %v784
        %v798 = vpack.c.b16 %v787, %v786
        %v799 = vpack.c.b16 %v789, %v788
        %v800 = vpack.c.b16 %v791, %v790
        %v801 = vpack.c.b16 %v793, %v792
        %810 = vmatprep.subr.bf16.mxu0 0
        %811 = vmatpush1.bf16.msra.mxu0 %v801
        %812 = vmatprep.subr.bf16.mxu0 0
        %813 = vmatpush1.bf16.msra.mxu0 %v800
        %814 = vmatprep.subr.bf16.mxu0 0
        %815 = vmatpush1.bf16.msra.mxu0 %v799
        %816 = vmatprep.subr.bf16.mxu0 0
        %817 = vmatpush1.bf16.msra.mxu0 %v798
        %818 = vmatprep.subr.bf16.mxu0 0
        %819 = vmatpush1.bf16.msra.mxu0 %v797
        %820 = vmatprep.subr.bf16.mxu0 0
        %821 = vmatpush1.bf16.msra.mxu0 %v796
        %822 = vmatprep.subr.bf16.mxu0 0
        %823 = vmatpush1.bf16.msra.mxu0 %v795
        %824 = vmatprep.subr.bf16.mxu0 0
        %825 = vmatpush1.bf16.msra.mxu0 %v794
        %826 = vmatprep.subr.bf16.mxu0 0
        %827 = vmatpush2.bf16.msra.mxu0 0
        %828 = vmatprep.subr.bf16.mxu0 0
        %829 = vmatpush2.bf16.msra.mxu0 0
        %830 = vmatprep.subr.bf16.mxu0 0
        %831 = vmatpush2.bf16.msra.mxu0 0
        %832 = vmatprep.subr.bf16.mxu0 0
        %833 = vmatpush2.bf16.msra.mxu0 0
        %834 = vmatprep.subr.bf16.mxu0 0
        %835 = vmatpush2.bf16.msra.mxu0 0
        %836 = vmatprep.subr.bf16.mxu0 0
        %837 = vmatpush2.bf16.msra.mxu0 0
        %838 = vmatprep.subr.bf16.mxu0 0
        %839 = vmatpush2.bf16.msra.mxu0 0
        %840 = vmatprep.subr.bf16.mxu0 0
        %841 = vmatpush2.bf16.msra.mxu0 0
        %842 = vmatprep.mubr.bf16.mxu0 0
        %843 = vmatmul.mubr.bf16.gmra.mxu0 %v626
        %v844 = vpop.f32.mrf.mxu0
        %v845 = vadd.f32 %v757, %v844
        %v846 = vpop.f32.mrf.mxu0
        %v847 = vpop.f32.mrf.mxu0
        %v848 = vpop.f32.mrf.mxu0
        %849 = vdwg.mxu0
        %v850 = vld [vmem:[#allocation2] sm:$0xe]
        %s851 = scalar_lea.vmem [#allocation6], 128
        %v852 = vld [vmem:[%s851] sm:$0xf]
        %v853 = vld [vmem:[%s851 + $0x4] sm:$0xf]
        %v854 = vld [vmem:[%s851 + $0x8] sm:$0xf]
        %v855 = vld [vmem:[%s851 + $0xc] sm:$0xf]
        %v856 = vld [vmem:[%s851 + $0x10] sm:$0xf]
        %v857 = vld [vmem:[%s851 + $0x14] sm:$0xf]
        %v858 = vld [vmem:[%s851 + $0x18] sm:$0xf]
        %v859 = vld [vmem:[%s851 + $0x1c] sm:$0xf]
        %v860 = vld [vmem:[%s851 + $0x20] sm:$0xf]
        %v861 = vld [vmem:[%s851 + $0x24] sm:$0xf]
        %v862 = vld [vmem:[%s851 + $0x28] sm:$0xf]
        %v863 = vld [vmem:[%s851 + $0x2c] sm:$0xf]
        %v864 = vld [vmem:[%s851 + $0x30] sm:$0xf]
        %v865 = vld [vmem:[%s851 + $0x34] sm:$0xf]
        %v866 = vld [vmem:[%s851 + $0x38] sm:$0xf]
        %v867 = vld [vmem:[%s851 + $0x3c] sm:$0xf]
        %v869 = vunpack.c.l.b16 %v850
        %v870 = vpack.c.b16 %v664, %v869
        %v871 = vrot.slane %v870, 1
        %v889 = vunpack.c.l.b16 %v852
        %v890 = vunpack.c.l.b16 %v853
        %v891 = vunpack.c.l.b16 %v854
        %v892 = vunpack.c.l.b16 %v855
        %v893 = vunpack.c.l.b16 %v856
        %v894 = vunpack.c.l.b16 %v857
        %v895 = vunpack.c.l.b16 %v858
        %v896 = vunpack.c.l.b16 %v859
        %v897 = vunpack.c.l.b16 %v860
        %v898 = vunpack.c.l.b16 %v861
        %v899 = vunpack.c.l.b16 %v862
        %v900 = vunpack.c.l.b16 %v863
        %v901 = vunpack.c.l.b16 %v864
        %v902 = vunpack.c.l.b16 %v865
        %v903 = vunpack.c.l.b16 %v866
        %v904 = vunpack.c.l.b16 %v867
        %v905 = vpack.c.b16 %v890, %v889
        %v906 = vpack.c.b16 %v892, %v891
        %v907 = vpack.c.b16 %v894, %v893
        %v908 = vpack.c.b16 %v896, %v895
        %v909 = vpack.c.b16 %v898, %v897
        %v910 = vpack.c.b16 %v900, %v899
        %v911 = vpack.c.b16 %v902, %v901
        %v912 = vpack.c.b16 %v904, %v903
        %921 = vmatprep.subr.bf16.mxu0 0
        %922 = vmatpush1.bf16.msra.mxu0 %v912
        %923 = vmatprep.subr.bf16.mxu0 0
        %924 = vmatpush1.bf16.msra.mxu0 %v911
        %925 = vmatprep.subr.bf16.mxu0 0
        %926 = vmatpush1.bf16.msra.mxu0 %v910
        %927 = vmatprep.subr.bf16.mxu0 0
        %928 = vmatpush1.bf16.msra.mxu0 %v909
        %929 = vmatprep.subr.bf16.mxu0 0
        %930 = vmatpush1.bf16.msra.mxu0 %v908
        %931 = vmatprep.subr.bf16.mxu0 0
        %932 = vmatpush1.bf16.msra.mxu0 %v907
        %933 = vmatprep.subr.bf16.mxu0 0
        %934 = vmatpush1.bf16.msra.mxu0 %v906
        %935 = vmatprep.subr.bf16.mxu0 0
        %936 = vmatpush1.bf16.msra.mxu0 %v905
        %937 = vmatprep.subr.bf16.mxu0 0
        %938 = vmatpush2.bf16.msra.mxu0 0
        %939 = vmatprep.subr.bf16.mxu0 0
        %940 = vmatpush2.bf16.msra.mxu0 0
        %941 = vmatprep.subr.bf16.mxu0 0
        %942 = vmatpush2.bf16.msra.mxu0 0
        %943 = vmatprep.subr.bf16.mxu0 0
        %944 = vmatpush2.bf16.msra.mxu0 0
        %945 = vmatprep.subr.bf16.mxu0 0
        %946 = vmatpush2.bf16.msra.mxu0 0
        %947 = vmatprep.subr.bf16.mxu0 0
        %948 = vmatpush2.bf16.msra.mxu0 0
        %949 = vmatprep.subr.bf16.mxu0 0
        %950 = vmatpush2.bf16.msra.mxu0 0
        %951 = vmatprep.subr.bf16.mxu0 0
        %952 = vmatpush2.bf16.msra.mxu0 0
        %953 = vmatprep.mubr.bf16.mxu0 0
        %954 = vmatmul.mubr.bf16.gmra.mxu0 %v871
        %v955 = vpop.f32.mrf.mxu0
        %v956 = vadd.f32 0.0, %v955
        %v957 = vpop.f32.mrf.mxu0
        %v958 = vpop.f32.mrf.mxu0
        %v959 = vpop.f32.mrf.mxu0
        %960 = vdwg.mxu0
        %v961 = vadd.f32 %v845, %v956
        %v962 = vld [vmem:[%s6] sm:$0x1]
        %v964 = vlaneseq
        %v965 = vshrl.u32 %v964, 7
        %v966 = vsub.s32 0, %v965
        %v967 = vrot.slane %v962, %v966
        %v969 = vmul.f32 %v961, %v967
        %v970 = vld [vmem:[%s7] sm:$0x1]
        %v972 = vlaneseq
        %v973 = vshrl.u32 %v972, 7
        %v974 = vsub.s32 0, %v973
        %v975 = vrot.slane %v970, %v974
        %v977 = vadd.f32 %v969, %v975
        %v978 = vld [vmem:[%s350] sm:$0xff]
        %v979 = vadd.f32 %v977, %v978
        %v980 = vmax.f32 %v979, 0.0
        %981 = vst [vmem:[%s341] sm:$0xff] %v980
        %s982 = sand.u32 %s210, 1
        %s983 = scalar_lea.sflag [#allocation5], %s982
        %s984 = sand.u32 %s210, 1
        %s985 = smul.addr %s984, 8
        %s986 = scalar_lea.vmem [#allocation8], %s985
        // Predicated region
        $region61: #{tpu_custom_call.1} parent=51 // pred_check
          %p987 = pneg %p220
        $region62: #{tpu_custom_call.1} parent=51 // pred_check_branch
          %989 = sbr.rel (%p987) target = $region64
        $region63: #{tpu_custom_call.1} parent=51 // pred_region
          %s991 = ssub.s32 128, 128
          %992 = vsyncadd %s983, %s991
          %s993 = smul.addr %s24, 128
          %s994 = scalar_lea.hbm %s8, %s993
          %s996 = sshll.u32 %s986, 4
          %s997 = int_to_ptr.vmem [resolvable:$true] %s996
          %999 = dma.vmem_to_hbm [thread:$0]  %s997, 128, %s994, %s983
        $region64: #{tpu_custom_call.1} parent=51 // pred_fallthru
          _
      $region52: #{tpu_custom_call.1} parent=5 // pred_fallthru
        _
      %p1000 = scmp.le.s32.totalorder 2, %s19
      // Predicated region
      $region65: #{tpu_custom_call.1} parent=5 // pred_check
        %p1001 = pneg %p1000
      $region66: #{tpu_custom_call.1} parent=5 // pred_check_branch
        %1003 = sbr.rel (%p1001) target = $region68
      $region67: #{tpu_custom_call.1} parent=5 // pred_region
        %s1004 = ssub.s32 %s19, 2
        // Predicated region
        $region69: #{tpu_custom_call.1} parent=67 // pred_check
          %p1005 = pneg %p226
        $region70: #{tpu_custom_call.1} parent=67 // pred_check_branch
          %1007 = sbr.rel (%p1005) target = $region72
        $region71: #{tpu_custom_call.1} parent=67 // pred_region
          %s1008 = sand.u32 %s211, 1
          %s1009 = scalar_lea.sflag [#allocation5], %s1008
          %s1010 = sand.u32 %s211, 1
          %s1011 = smul.addr %s1010, 8
          %s1012 = scalar_lea.vmem [#allocation8], %s1011
          %1013 = dma.done %s1009, 128
        $region72: #{tpu_custom_call.1} parent=67 // pred_fallthru
          _
      $region68: #{tpu_custom_call.1} parent=5 // pred_fallthru
        _
    $region6: #{tpu_custom_call.1} parent=1 // loop_footer
      %s23 = sadd.s32 1, %s19
    $region7: #{tpu_custom_call.1} parent=1 // loop_footer_branch
      %18 = sbr.rel target = $region3
    $region8: #{tpu_custom_call.1} parent=1 // loop_exit
      _
    %1014 = vsyncpa [#allocation4], 1
    %s1015 = scalar_lea.sflag [#allocation4], 1
    %1016 = vsyncpa %s1015, 1
    %1017 = vsyncpa [#allocation7], 1
    %1018 = vsyncpa [#allocation5], 1
    %s1019 = scalar_lea.sflag [#allocation5], 1
    %1020 = vsyncpa %s1019, 1

</llo_original>
